<compile_context>
chip_gen: v6e
topology: v6e:2x2x1
jax: 0.10.0
libtpu: 0.0.40
codegen_flags: <defaults>
</compile_context>

<pallas_src>
import jax
import jax.numpy as jnp
from jax.experimental import pallas as pl
from jax.experimental.pallas import tpu as pltpu


def mlp_kernel(x_ref, w1_ref, b1_ref, w2_ref, b2_ref, w3_ref, b3_ref,
               w4_ref, b4_ref, out_ref):
    """Fused 3-hidden-layer MLP + linear estimator, feature-major (W @ X).

    x_ref:   (d0, TN)  bf16   (batch tile on the lane axis)
    w*_ref:  (d_out, d_in) bf16, VMEM-resident across the whole grid
    b*_ref:  (d_out, 1) f32
    out_ref: (1, TN)   f32    (lane-dense output tile)
    """
    # Layer 1: bf16 x bf16 -> f32 accumulate.
    h = jnp.dot(w1_ref[...], x_ref[...], preferred_element_type=jnp.float32) + b1_ref[...]
    h = jnp.maximum(h, 0.0)                                                  # f32 (d1, TN)

    # Layers 2-3: keep activations f32 (no bf16 re-pack; MXU has plenty of slack).
    h = jnp.dot(w2_ref[...], h, preferred_element_type=jnp.float32) + b2_ref[...]
    h = jnp.maximum(h, 0.0)

    h = jnp.dot(w3_ref[...], h, preferred_element_type=jnp.float32) + b3_ref[...]
    h = jnp.maximum(h, 0.0)

    # Estimator.
    out = jnp.dot(w4_ref[...], h, preferred_element_type=jnp.float32) + b4_ref[...]
    out_ref[...] = out.astype(out_ref.dtype)                                 # (1, TN)


def mlp_forward(x, params, *, batch_tile=4096):
    """Forward pass of the MLP.

    x:      (N, d0) float32, sample-major (PyTorch convention).
    params: list of 4 (W, b) tuples in PyTorch layout: W (out_features, in_features),
            b (out_features,). Layers 1-3 are followed by ReLU; layer 4 is the estimator.
    returns (N, 1) float32, matching `estimator(main_net(x))`.
    """
    (w1, b1), (w2, b2), (w3, b3), (w4, b4) = params
    n, d0 = x.shape
    assert w1.shape[1] == d0 and w4.shape[0] == 1

    # ---- batch tile selection -------------------------------------------------------
    # Lane blocks of 128; big tiles amortize the ~0.35us per-grid-step overhead, but keep
    # at least 2 grid steps when possible so v7x's second TensorCore gets work.
    n_blocks = pl.cdiv(n, 128)                      # number of 128-wide lane blocks
    tn = min(batch_tile, n_blocks * 128)
    if n_blocks >= 2:
        tn = min(tn, pl.cdiv(n_blocks, 2) * 128)    # cap so grid has >= 2 steps
    tn = max(128, (tn // 128) * 128)
    n_pad = pl.cdiv(n, tn) * tn
    grid = (n_pad // tn,)

    # ---- input prep -----------------------------------------------------------------
    # Feature-major, lane-dense, bf16 x. Single fuseable transpose+cast+pad expression
    # (no zeros().at[].set() round trip through a padded buffer).
    x_t = jnp.pad(x.T.astype(jnp.bfloat16), ((0, 0), (0, n_pad - n)))        # (d0, n_pad)

    def prep(w, b):
        return w.astype(jnp.bfloat16), b.reshape(-1, 1).astype(jnp.float32)

    w1, b1 = prep(w1, b1)
    w2, b2 = prep(w2, b2)
    w3, b3 = prep(w3, b3)
    w4, b4 = prep(w4, b4)

    # Weights/biases: full-array blocks with constant index maps -> VMEM-resident,
    # fetched once; only x and out are pipelined over the batch grid.
    def resident(a):
        return pl.BlockSpec(a.shape, lambda i, nd=a.ndim: (0,) * nd)

    flops = 2 * n_pad * (w1.shape[0] * w1.shape[1] + w2.shape[0] * w2.shape[1]
                         + w3.shape[0] * w3.shape[1] + w4.shape[0] * w4.shape[1])
    bytes_accessed = int(sum(a.size * a.dtype.itemsize
                             for a in (x_t, w1, b1, w2, b2, w3, b3, w4, b4))
                         + n_pad * 4)

    out_pad = pl.pallas_call(
        mlp_kernel,
        out_shape=jax.ShapeDtypeStruct((1, n_pad), jnp.float32),
        grid_spec=pltpu.PrefetchScalarGridSpec(
            num_scalar_prefetch=0,
            grid=grid,
            # TODO(synk): if a profile still shows exposed x DMA at large tn, add
            # pipeline_mode=pl.Buffered(3) to the x BlockSpec (third buffer is tiny).
            in_specs=[pl.BlockSpec((d0, tn), lambda i: (0, i)),
                      resident(w1), resident(b1),
                      resident(w2), resident(b2),
                      resident(w3), resident(b3),
                      resident(w4), resident(b4)],
            out_specs=pl.BlockSpec((1, tn), lambda i: (0, i)),
        ),
        compiler_params=pltpu.CompilerParams(
            dimension_semantics=("parallel",),          # shard batch tiles across TCs (v7x)
            # Ample for this kernel even at tn=4096 (x buffers ~128 KiB, out ~16 KiB,
            # weights ~7 KiB); kept well under v7x's 64 MiB physical VMEM.
            vmem_limit_bytes=32 * 1024 * 1024,
        ),
        cost_estimate=pl.CostEstimate(flops=flops, transcendentals=0,
                                      bytes_accessed=bytes_accessed),
    )(x_t, w1, b1, w2, b2, w3, b3, w4, b4)

    # Back to sample-major (N, 1), dropping batch padding.
    return out_pad[:, :n].T


def init_linear(key, fan_in, fan_out):
    """Deterministic PyTorch-style Linear init: U(-1/sqrt(fan_in), 1/sqrt(fan_in)).

    Returns W in PyTorch layout (out_features, in_features) and b (out_features,).
    """
    kw, kb = jax.random.split(key)
    bound = 1.0 / jnp.sqrt(jnp.float32(fan_in))
    w = jax.random.uniform(kw, (fan_out, fan_in), jnp.float32, -bound, bound)
    b = jax.random.uniform(kb, (fan_out,), jnp.float32, -bound, bound)
    return w, b


def ref_forward(x, params):
    """Plain-JAX reference matching the kernel's math:
    bf16 x / bf16 weights, f32 accumulate, f32 activations after every ReLU."""
    h = x.astype(jnp.bfloat16)
    for i, (w, b) in enumerate(params):
        h = jnp.dot(h, w.astype(jnp.bfloat16).T,
                    preferred_element_type=jnp.float32) + b[None, :]
        if i < 3:
            h = jnp.maximum(h, 0.0)          # stays f32 (matches kernel)
    return h


if __name__ == "__main__":
    key = jax.random.PRNGKey(0)

    # ndim per the module docstring style: (in, h1, h2, h3); estimator -> 1
    ndim = (16, 32, 32, 16)
    batch = 8

    k_x, k1, k2, k3, k4 = jax.random.split(key, 5)
    x = jax.random.normal(k_x, (batch, ndim[0]), jnp.float32)

    params = [
        init_linear(k1, ndim[0], ndim[1]),
        init_linear(k2, ndim[1], ndim[2]),
        init_linear(k3, ndim[2], ndim[3]),
        init_linear(k4, ndim[3], 1),        # estimator = Linear(ndim[-1], 1)
    ]

    y = mlp_forward(x, params)
    jax.block_until_ready(y)

    y_ref = ref_forward(x, params)
    assert y.shape == (batch, 1)
    assert jnp.allclose(y, y_ref, atol=1e-4, rtol=1e-4), float(jnp.max(jnp.abs(y - y_ref)))

    # TODO(synk): training-side methods (loss_batch / fit / predict / Sigmoid for
    # BaseClassifier subclasses) are out of scope for this forward-pass kernel.
    print("KERNEL_OK")
</pallas_src>

<mosaic_0001>
module attributes {stable_mosaic.version = 11 : i64} {
  func.func @mlp_kernel(%arg0: i32, %arg1: memref<16x128xbf16, #tpu.memory_space<vmem>>, %arg2: memref<32x16xbf16, #tpu.memory_space<vmem>>, %arg3: memref<32x1xf32, #tpu.memory_space<vmem>>, %arg4: memref<32x32xbf16, #tpu.memory_space<vmem>>, %arg5: memref<32x1xf32, #tpu.memory_space<vmem>>, %arg6: memref<16x32xbf16, #tpu.memory_space<vmem>>, %arg7: memref<16x1xf32, #tpu.memory_space<vmem>>, %arg8: memref<1x16xbf16, #tpu.memory_space<vmem>>, %arg9: memref<1x1xf32, #tpu.memory_space<vmem>>, %arg10: memref<1x128xf32, #tpu.memory_space<vmem>>) attributes {dimension_semantics = [#tpu.dimension_semantics<parallel>], iteration_bounds = array<i64: 1>, scalar_prefetch = 0 : i64, scratch_operands = 0 : i64, tpu.core_type = #tpu.core_type<tc>, window_params = [{transform_indices = @transform_0, window_bounds = array<i64: 16, 128>}, {pipeline_mode = #tpu.pipeline_mode<synchronous>, transform_indices = @transform_1, window_bounds = array<i64: 32, 16>}, {pipeline_mode = #tpu.pipeline_mode<synchronous>, transform_indices = @transform_2, window_bounds = array<i64: 32, 1>}, {pipeline_mode = #tpu.pipeline_mode<synchronous>, transform_indices = @transform_3, window_bounds = array<i64: 32, 32>}, {pipeline_mode = #tpu.pipeline_mode<synchronous>, transform_indices = @transform_4, window_bounds = array<i64: 32, 1>}, {pipeline_mode = #tpu.pipeline_mode<synchronous>, transform_indices = @transform_5, window_bounds = array<i64: 16, 32>}, {pipeline_mode = #tpu.pipeline_mode<synchronous>, transform_indices = @transform_6, window_bounds = array<i64: 16, 1>}, {pipeline_mode = #tpu.pipeline_mode<synchronous>, transform_indices = @transform_7, window_bounds = array<i64: 1, 16>}, {pipeline_mode = #tpu.pipeline_mode<synchronous>, transform_indices = @transform_8, window_bounds = array<i64: 1, 1>}, {transform_indices = @transform_9, window_bounds = array<i64: 1, 128>}]} {
    %c0 = arith.constant 0 : index
    %c0_0 = arith.constant 0 : index
    %0 = vector.load %arg2[%c0, %c0_0] : memref<32x16xbf16, #tpu.memory_space<vmem>>, vector<32x16xbf16>
    %c0_1 = arith.constant 0 : index
    %c0_2 = arith.constant 0 : index
    %1 = vector.load %arg1[%c0_1, %c0_2] : memref<16x128xbf16, #tpu.memory_space<vmem>>, vector<16x128xbf16>
    %cst = arith.constant dense<0.000000e+00> : vector<32x128xf32>
    %2 = tpu.matmul %0, %1, %cst {dimension_numbers = #tpu.dot_dimension_numbers<[1], [0], [0], [1], [0, 0, 1, 1], [], []>} : vector<32x16xbf16>, vector<16x128xbf16>, vector<32x128xf32> -> vector<32x128xf32>
    %c0_3 = arith.constant 0 : index
    %c0_4 = arith.constant 0 : index
    %3 = vector.load %arg3[%c0_3, %c0_4] : memref<32x1xf32, #tpu.memory_space<vmem>>, vector<32x1xf32>
    %4 = vector.broadcast %3 : vector<32x1xf32> to vector<32x128xf32>
    %5 = arith.addf %2, %4 : vector<32x128xf32>
    %cst_5 = arith.constant 0.000000e+00 : f32
    %6 = vector.broadcast %cst_5 : f32 to vector<32x128xf32>
    %7 = arith.maximumf %5, %6 : vector<32x128xf32>
    %c0_6 = arith.constant 0 : index
    %c0_7 = arith.constant 0 : index
    %8 = vector.load %arg4[%c0_6, %c0_7] : memref<32x32xbf16, #tpu.memory_space<vmem>>, vector<32x32xbf16>
    %cst_8 = arith.constant dense<0.000000e+00> : vector<32x128xf32>
    %9 = tpu.matmul %8, %7, %cst_8 {dimension_numbers = #tpu.dot_dimension_numbers<[1], [0], [0], [1], [0, 0, 1, 1], [], []>} : vector<32x32xbf16>, vector<32x128xf32>, vector<32x128xf32> -> vector<32x128xf32>
    %c0_9 = arith.constant 0 : index
    %c0_10 = arith.constant 0 : index
    %10 = vector.load %arg5[%c0_9, %c0_10] : memref<32x1xf32, #tpu.memory_space<vmem>>, vector<32x1xf32>
    %11 = vector.broadcast %10 : vector<32x1xf32> to vector<32x128xf32>
    %12 = arith.addf %9, %11 : vector<32x128xf32>
    %cst_11 = arith.constant 0.000000e+00 : f32
    %13 = vector.broadcast %cst_11 : f32 to vector<32x128xf32>
    %14 = arith.maximumf %12, %13 : vector<32x128xf32>
    %c0_12 = arith.constant 0 : index
    %c0_13 = arith.constant 0 : index
    %15 = vector.load %arg6[%c0_12, %c0_13] : memref<16x32xbf16, #tpu.memory_space<vmem>>, vector<16x32xbf16>
    %cst_14 = arith.constant dense<0.000000e+00> : vector<16x128xf32>
    %16 = tpu.matmul %15, %14, %cst_14 {dimension_numbers = #tpu.dot_dimension_numbers<[1], [0], [0], [1], [0, 0, 1, 1], [], []>} : vector<16x32xbf16>, vector<32x128xf32>, vector<16x128xf32> -> vector<16x128xf32>
    %c0_15 = arith.constant 0 : index
    %c0_16 = arith.constant 0 : index
    %17 = vector.load %arg7[%c0_15, %c0_16] : memref<16x1xf32, #tpu.memory_space<vmem>>, vector<16x1xf32>
    %18 = vector.broadcast %17 : vector<16x1xf32> to vector<16x128xf32>
    %19 = arith.addf %16, %18 : vector<16x128xf32>
    %cst_17 = arith.constant 0.000000e+00 : f32
    %20 = vector.broadcast %cst_17 : f32 to vector<16x128xf32>
    %21 = arith.maximumf %19, %20 : vector<16x128xf32>
    %c0_18 = arith.constant 0 : index
    %c0_19 = arith.constant 0 : index
    %22 = vector.load %arg8[%c0_18, %c0_19] : memref<1x16xbf16, #tpu.memory_space<vmem>>, vector<1x16xbf16>
    %cst_20 = arith.constant dense<0.000000e+00> : vector<1x128xf32>
    %23 = tpu.matmul %22, %21, %cst_20 {dimension_numbers = #tpu.dot_dimension_numbers<[1], [0], [0], [1], [0, 0, 1, 1], [], []>} : vector<1x16xbf16>, vector<16x128xf32>, vector<1x128xf32> -> vector<1x128xf32>
    %c0_21 = arith.constant 0 : index
    %c0_22 = arith.constant 0 : index
    %24 = vector.load %arg9[%c0_21, %c0_22] : memref<1x1xf32, #tpu.memory_space<vmem>>, vector<1x1xf32>
    %25 = vector.broadcast %24 : vector<1x1xf32> to vector<1x128xf32>
    %26 = arith.addf %23, %25 : vector<1x128xf32>
    %c0_23 = arith.constant 0 : index
    %c0_24 = arith.constant 0 : index
    %27 = vector.load %arg10[%c0_23, %c0_24] : memref<1x128xf32, #tpu.memory_space<vmem>>, vector<1x128xf32>
    tpu.vector_store %arg10[%c0_23, %c0_24], %26 {strides = array<i32>} : memref<1x128xf32, #tpu.memory_space<vmem>>, vector<1x128xf32>,
    return
  }
  func.func @transform_0(%arg0: i32) -> (i32, i32) {
    %c0_i32 = arith.constant 0 : i32
    %c0_i32_0 = arith.constant 0 : i32
    return %c0_i32, %arg0 : i32, i32
  }
  func.func @transform_1(%arg0: i32) -> (i32, i32) {
    %c0_i32 = arith.constant 0 : i32
    %c0_i32_0 = arith.constant 0 : i32
    %c0_i32_1 = arith.constant 0 : i32
    return %c0_i32, %c0_i32_0 : i32, i32
  }
  func.func @transform_2(%arg0: i32) -> (i32, i32) {
    %c0_i32 = arith.constant 0 : i32
    %c0_i32_0 = arith.constant 0 : i32
    %c0_i32_1 = arith.constant 0 : i32
    return %c0_i32, %c0_i32_0 : i32, i32
  }
  func.func @transform_3(%arg0: i32) -> (i32, i32) {
    %c0_i32 = arith.constant 0 : i32
    %c0_i32_0 = arith.constant 0 : i32
    %c0_i32_1 = arith.constant 0 : i32
    return %c0_i32, %c0_i32_0 : i32, i32
  }
  func.func @transform_4(%arg0: i32) -> (i32, i32) {
    %c0_i32 = arith.constant 0 : i32
    %c0_i32_0 = arith.constant 0 : i32
    %c0_i32_1 = arith.constant 0 : i32
    return %c0_i32, %c0_i32_0 : i32, i32
  }
  func.func @transform_5(%arg0: i32) -> (i32, i32) {
    %c0_i32 = arith.constant 0 : i32
    %c0_i32_0 = arith.constant 0 : i32
    %c0_i32_1 = arith.constant 0 : i32
    return %c0_i32, %c0_i32_0 : i32, i32
  }
  func.func @transform_6(%arg0: i32) -> (i32, i32) {
    %c0_i32 = arith.constant 0 : i32
    %c0_i32_0 = arith.constant 0 : i32
    %c0_i32_1 = arith.constant 0 : i32
    return %c0_i32, %c0_i32_0 : i32, i32
  }
  func.func @transform_7(%arg0: i32) -> (i32, i32) {
    %c0_i32 = arith.constant 0 : i32
    %c0_i32_0 = arith.constant 0 : i32
    %c0_i32_1 = arith.constant 0 : i32
    return %c0_i32, %c0_i32_0 : i32, i32
  }
  func.func @transform_8(%arg0: i32) -> (i32, i32) {
    %c0_i32 = arith.constant 0 : i32
    %c0_i32_0 = arith.constant 0 : i32
    %c0_i32_1 = arith.constant 0 : i32
    return %c0_i32, %c0_i32_0 : i32, i32
  }
  func.func @transform_9(%arg0: i32) -> (i32, i32) {
    %c0_i32 = arith.constant 0 : i32
    %c0_i32_0 = arith.constant 0 : i32
    return %c0_i32, %arg0 : i32, i32
  }
}

</mosaic_0001>

<llo_original>
// kernel: tpu_custom_call.1
$region0: #{tpu_custom_call.1}
  #allocation0 [shape = 'u32[]', space=smem, size = 0x4, offset = 0x4, fixed_abs, tag = 'smem constant byte address 0x4 - core index']
  #allocation1 [shape = 'u32[144,128]{1,0:T(1,128)}', space=vmem, size = 0x12000, scoped, tag = 'internal scratch']
  #allocation2 [shape = 'f32[1,1]{1,0:T(1,128)S(1)}', space=vmem, size = 0x200, scoped, tag = 'scoped memory for tpu_custom_call.1']
  %s0 = inlined_call_operand.vmem [shape: bf16[16,128], index: 0, kind: input, shape index: {}]
  %s1 = inlined_call_operand.vmem [shape: bf16[32,16], index: 1, kind: input, shape index: {}]
  %s2 = inlined_call_operand.vmem [shape: f32[32,1], index: 2, kind: input, shape index: {}]
  %s3 = inlined_call_operand.vmem [shape: bf16[32,32], index: 3, kind: input, shape index: {}]
  %s4 = inlined_call_operand.vmem [shape: f32[32,1], index: 4, kind: input, shape index: {}]
  %s5 = inlined_call_operand.vmem [shape: bf16[16,32], index: 5, kind: input, shape index: {}]
  %s6 = inlined_call_operand.vmem [shape: f32[16,1], index: 6, kind: input, shape index: {}]
  %s7 = inlined_call_operand.vmem [shape: bf16[1,16], index: 7, kind: input, shape index: {}]
  %s8 = inlined_call_operand.<no memory space> [shape: f32[1,1], index: 8, kind: input, shape index: {}]
  %s9 = inlined_call_operand.hbm [shape: f32[1,128], index: 9, kind: output, shape index: {}]
  %s10 = sld [smem:[#allocation0]]
  $region46: #{tpu_custom_call.1} parent=0
    _
  %s12 = ssub.s32 1, %s10
  %s13 = scalar_select 0, %s12, %s10
  %v14 = vstv %s8
  %15 = vst [vmem:[#allocation2] sm:$0x1] %v14
  $region1: #{tpu_custom_call.1} parent=0
    #allocation3 [shape = 'u8[512]{0}', space=vmem, size = 0x400, scoped, tag = 'output window, operand 0, single buffered']
    #allocation4 [shape = 's32[1]{0}', space=sflag, size = 0x4, scoped, tag = 'scoped memory for tpu_custom_call.1']
    %16 = vsyncpa [#allocation4], 0
    // Predicated region
    $region2: #{tpu_custom_call.1} parent=1 // pred_check
      _
    $region3: #{tpu_custom_call.1} parent=1 // pred_check_branch
      %18 = sbr.rel (0) target = $region5
    $region4: #{tpu_custom_call.1} parent=1 // pred_region
      _
    $region5: #{tpu_custom_call.1} parent=1 // pred_fallthru
      _
    // Predicated region
    $region6: #{tpu_custom_call.1} parent=1 // pred_check
      _
    $region7: #{tpu_custom_call.1} parent=1 // pred_check_branch
      %20 = sbr.rel (0) target = $region9
    $region8: #{tpu_custom_call.1} parent=1 // pred_region
      _
    $region9: #{tpu_custom_call.1} parent=1 // pred_fallthru
      _
    // Predicated region
    $region10: #{tpu_custom_call.1} parent=1 // pred_check
      _
    $region11: #{tpu_custom_call.1} parent=1 // pred_check_branch
      %22 = sbr.rel (0) target = $region13
    $region12: #{tpu_custom_call.1} parent=1 // pred_region
      _
    $region13: #{tpu_custom_call.1} parent=1 // pred_fallthru
      _
    // Predicated region
    $region14: #{tpu_custom_call.1} parent=1 // pred_check
      _
    $region15: #{tpu_custom_call.1} parent=1 // pred_check_branch
      %24 = sbr.rel (0) target = $region17
    $region16: #{tpu_custom_call.1} parent=1 // pred_region
      _
    $region17: #{tpu_custom_call.1} parent=1 // pred_fallthru
      _
    // Predicated region
    $region18: #{tpu_custom_call.1} parent=1 // pred_check
      _
    $region19: #{tpu_custom_call.1} parent=1 // pred_check_branch
      %26 = sbr.rel (0) target = $region21
    $region20: #{tpu_custom_call.1} parent=1 // pred_region
      _
    $region21: #{tpu_custom_call.1} parent=1 // pred_fallthru
      _
    // Predicated region
    $region22: #{tpu_custom_call.1} parent=1 // pred_check
      _
    $region23: #{tpu_custom_call.1} parent=1 // pred_check_branch
      %28 = sbr.rel (0) target = $region25
    $region24: #{tpu_custom_call.1} parent=1 // pred_region
      _
    $region25: #{tpu_custom_call.1} parent=1 // pred_fallthru
      _
    // Predicated region
    $region26: #{tpu_custom_call.1} parent=1 // pred_check
      _
    $region27: #{tpu_custom_call.1} parent=1 // pred_check_branch
      %30 = sbr.rel (0) target = $region29
    $region28: #{tpu_custom_call.1} parent=1 // pred_region
      _
    $region29: #{tpu_custom_call.1} parent=1 // pred_fallthru
      _
    // Predicated region
    $region30: #{tpu_custom_call.1} parent=1 // pred_check
      _
    $region31: #{tpu_custom_call.1} parent=1 // pred_check_branch
      %32 = sbr.rel (0) target = $region33
    $region32: #{tpu_custom_call.1} parent=1 // pred_region
      _
    $region33: #{tpu_custom_call.1} parent=1 // pred_fallthru
      _
    // Predicated region
    $region34: #{tpu_custom_call.1} parent=1 // pred_check
      _
    $region35: #{tpu_custom_call.1} parent=1 // pred_check_branch
      %34 = sbr.rel (0) target = $region37
    $region36: #{tpu_custom_call.1} parent=1 // pred_region
      _
    $region37: #{tpu_custom_call.1} parent=1 // pred_fallthru
      _
    %v36 = vld [vmem:[%s1] sm:$0xf]
    %v37 = vld [vmem:[%s1 + $0x4] sm:$0xf]
    %v38 = vld [vmem:[%s1 + $0x8] sm:$0xf]
    %v39 = vld [vmem:[%s1 + $0xc] sm:$0xf]
    %v40 = vld [vmem:[%s0] sm:$0xf]
    %v41 = vld [vmem:[%s0 + $0x4] sm:$0xf]
    %v42 = vld [vmem:[%s2] sm:$0xff]
    %v43 = vld [vmem:[%s2 + $0x8] sm:$0xff]
    %v44 = vld [vmem:[%s2 + $0x10] sm:$0xff]
    %v45 = vld [vmem:[%s2 + $0x18] sm:$0xff]
    %47 = vset.pattern.permute.xlu0 0
    %48 = vperm.xlu0 %47, %v42
    %v49 = vpop.permute.xlu0 %48
    %52 = vset.pattern.permute.xlu0 0
    %53 = vperm.xlu0 %52, %v43
    %v54 = vpop.permute.xlu0 %53
    %57 = vset.pattern.permute.xlu0 0
    %58 = vperm.xlu0 %57, %v44
    %v59 = vpop.permute.xlu0 %58
    %62 = vset.pattern.permute.xlu0 0
    %63 = vperm.xlu0 %62, %v45
    %v64 = vpop.permute.xlu0 %63
    %v70 = vunpack.c.l.b16 %v36
    %v71 = vunpack.c.l.b16 %v37
    %v72 = vunpack.c.l.b16 %v38
    %v73 = vunpack.c.l.b16 %v39
    %v74 = vpack.c.b16 %v71, %v70
    %v75 = vpack.c.b16 %v73, %v72
    %v78 = vunpack.c.l.b16 %v40
    %v79 = vunpack.c.l.b16 %v41
    %v80 = vpack.c.b16 %v79, %v78
    %vm82 = vcmask 130048
    %v84 = vsel %vm82, %v74, 0
    %v87 = vsel %vm82, %v75, 0
    %89 = vmatprep.subr.bf16.mxu0 0
    %90 = vmatpush1.bf16.msra.mxu0 0
    %91 = vmatprep.subr.bf16.mxu0 0
    %92 = vmatpush1.bf16.msra.mxu0 0
    %93 = vmatprep.subr.bf16.mxu0 0
    %94 = vmatpush1.bf16.msra.mxu0 0
    %95 = vmatprep.subr.bf16.mxu0 0
    %96 = vmatpush1.bf16.msra.mxu0 0
    %97 = vmatprep.subr.bf16.mxu0 0
    %98 = vmatpush1.bf16.msra.mxu0 0
    %99 = vmatprep.subr.bf16.mxu0 0
    %100 = vmatpush1.bf16.msra.mxu0 0
    %101 = vmatprep.subr.bf16.mxu0 0
    %102 = vmatpush1.bf16.msra.mxu0 0
    %103 = vmatprep.subr.bf16.mxu0 0
    %104 = vmatpush1.bf16.msra.mxu0 %v80
    %105 = vmatprep.subr.bf16.mxu0 0
    %106 = vmatpush2.bf16.msra.mxu0 0
    %107 = vmatprep.subr.bf16.mxu0 0
    %108 = vmatpush2.bf16.msra.mxu0 0
    %109 = vmatprep.subr.bf16.mxu0 0
    %110 = vmatpush2.bf16.msra.mxu0 0
    %111 = vmatprep.subr.bf16.mxu0 0
    %112 = vmatpush2.bf16.msra.mxu0 0
    %113 = vmatprep.subr.bf16.mxu0 0
    %114 = vmatpush2.bf16.msra.mxu0 0
    %115 = vmatprep.subr.bf16.mxu0 0
    %116 = vmatpush2.bf16.msra.mxu0 0
    %117 = vmatprep.subr.bf16.mxu0 0
    %118 = vmatpush2.bf16.msra.mxu0 0
    %119 = vmatprep.subr.bf16.mxu0 0
    %120 = vmatpush2.bf16.msra.mxu0 0
    %121 = vmatprep.mubr.bf16.mxu0 0
    %122 = vmatmul.mubr.bf16.gmra.mxu0 %v84
    %v123 = vpop.f32.mrf.mxu0
    %v124 = vadd.f32 %v49, %v123
    %v125 = vpop.f32.mrf.mxu0
    %v126 = vpop.f32.mrf.mxu0
    %v127 = vadd.f32 %v54, %v126
    %v128 = vpop.f32.mrf.mxu0
    %129 = vmatprep.mubr.bf16.mxu0 0
    %130 = vmatmul.mubr.bf16.gmra.mxu0 %v87
    %v131 = vpop.f32.mrf.mxu0
    %v132 = vadd.f32 %v59, %v131
    %v133 = vpop.f32.mrf.mxu0
    %v134 = vpop.f32.mrf.mxu0
    %v135 = vadd.f32 %v64, %v134
    %v136 = vpop.f32.mrf.mxu0
    %137 = vdwg.mxu0
    %v138 = vmax.f32 %v124, 0.0
    %v139 = vmax.f32 %v127, 0.0
    %v140 = vmax.f32 %v132, 0.0
    %v141 = vmax.f32 %v135, 0.0
    %v142 = vld [vmem:[%s3] sm:$0xf]
    %v143 = vld [vmem:[%s3 + $0x4] sm:$0xf]
    %v144 = vld [vmem:[%s3 + $0x8] sm:$0xf]
    %v145 = vld [vmem:[%s3 + $0xc] sm:$0xf]
    %v146 = vld [vmem:[%s4] sm:$0xff]
    %v147 = vld [vmem:[%s4 + $0x8] sm:$0xff]
    %v148 = vld [vmem:[%s4 + $0x10] sm:$0xff]
    %v149 = vld [vmem:[%s4 + $0x18] sm:$0xff]
    %151 = vset.pattern.permute.xlu0 0
    %152 = vperm.xlu0 %151, %v146
    %v153 = vpop.permute.xlu0 %152
    %156 = vset.pattern.permute.xlu0 0
    %157 = vperm.xlu0 %156, %v147
    %v158 = vpop.permute.xlu0 %157
    %161 = vset.pattern.permute.xlu0 0
    %162 = vperm.xlu0 %161, %v148
    %v163 = vpop.permute.xlu0 %162
    %166 = vset.pattern.permute.xlu0 0
    %167 = vperm.xlu0 %166, %v149
    %v168 = vpop.permute.xlu0 %167
    %v174 = vunpack.c.l.b16 %v142
    %v175 = vunpack.c.l.b16 %v143
    %v176 = vunpack.c.l.b16 %v144
    %v177 = vunpack.c.l.b16 %v145
    %v178 = vpack.c.b16 %v175, %v174
    %v179 = vpack.c.b16 %v177, %v176
    %vm180 = vcmask 261120
    %v182 = vsel %vm180, %v178, 0
    %v185 = vsel %vm180, %v179, 0
    %187 = vmatprep.subr.mxu0 0.0
    %188 = vmatpush1.msra.mxu0 0.0
    %189 = vmatprep.subr.mxu0 0.0
    %190 = vmatpush1.msra.mxu0 0.0
    %191 = vmatprep.subr.mxu0 0.0
    %192 = vmatpush1.msra.mxu0 0.0
    %193 = vmatprep.subr.mxu0 0.0
    %194 = vmatpush1.msra.mxu0 0.0
    %195 = vmatprep.subr.mxu0 0.0
    %196 = vmatpush1.msra.mxu0 0.0
    %197 = vmatprep.subr.mxu0 0.0
    %198 = vmatpush1.msra.mxu0 0.0
    %199 = vmatprep.subr.mxu0 0.0
    %200 = vmatpush1.msra.mxu0 0.0
    %201 = vmatprep.subr.mxu0 0.0
    %202 = vmatpush1.msra.mxu0 0.0
    %203 = vmatprep.subr.mxu0 0.0
    %204 = vmatpush1.msra.mxu0 0.0
    %205 = vmatprep.subr.mxu0 0.0
    %206 = vmatpush1.msra.mxu0 0.0
    %207 = vmatprep.subr.mxu0 0.0
    %208 = vmatpush1.msra.mxu0 0.0
    %209 = vmatprep.subr.mxu0 0.0
    %210 = vmatpush1.msra.mxu0 0.0
    %211 = vmatprep.subr.mxu0 0.0
    %212 = vmatpush1.msra.mxu0 %v141
    %213 = vmatprep.subr.mxu0 0.0
    %214 = vmatpush1.msra.mxu0 %v140
    %215 = vmatprep.subr.mxu0 0.0
    %216 = vmatpush1.msra.mxu0 %v139
    %217 = vmatprep.subr.mxu0 0.0
    %218 = vmatpush1.msra.mxu0 %v138
    %219 = vmatprep.subr.mxu0 0.0
    %220 = vmatpush2.msra.mxu0 0.0
    %221 = vmatprep.subr.mxu0 0.0
    %222 = vmatpush2.msra.mxu0 0.0
    %223 = vmatprep.subr.mxu0 0.0
    %224 = vmatpush2.msra.mxu0 0.0
    %225 = vmatprep.subr.mxu0 0.0
    %226 = vmatpush2.msra.mxu0 0.0
    %227 = vmatprep.subr.mxu0 0.0
    %228 = vmatpush2.msra.mxu0 0.0
    %229 = vmatprep.subr.mxu0 0.0
    %230 = vmatpush2.msra.mxu0 0.0
    %231 = vmatprep.subr.mxu0 0.0
    %232 = vmatpush2.msra.mxu0 0.0
    %233 = vmatprep.subr.mxu0 0.0
    %234 = vmatpush2.msra.mxu0 0.0
    %235 = vmatprep.subr.mxu0 0.0
    %236 = vmatpush2.msra.mxu0 0.0
    %237 = vmatprep.subr.mxu0 0.0
    %238 = vmatpush2.msra.mxu0 0.0
    %239 = vmatprep.subr.mxu0 0.0
    %240 = vmatpush2.msra.mxu0 0.0
    %241 = vmatprep.subr.mxu0 0.0
    %242 = vmatpush2.msra.mxu0 0.0
    %243 = vmatprep.subr.mxu0 0.0
    %244 = vmatpush2.msra.mxu0 0.0
    %245 = vmatprep.subr.mxu0 0.0
    %246 = vmatpush2.msra.mxu0 0.0
    %247 = vmatprep.subr.mxu0 0.0
    %248 = vmatpush2.msra.mxu0 0.0
    %249 = vmatprep.subr.mxu0 0.0
    %250 = vmatpush2.msra.mxu0 0.0
    %251 = vmatprep.mubr.bf16.mxu0 0
    %252 = vmatmul.mubr.bf16.gmra.mxu0 %v182
    %v253 = vpop.f32.mrf.mxu0
    %v254 = vadd.f32 %v153, %v253
    %v255 = vpop.f32.mrf.mxu0
    %v256 = vpop.f32.mrf.mxu0
    %v257 = vadd.f32 %v158, %v256
    %v258 = vpop.f32.mrf.mxu0
    %259 = vmatprep.mubr.bf16.mxu0 0
    %260 = vmatmul.mubr.bf16.gmra.mxu0 %v185
    %v261 = vpop.f32.mrf.mxu0
    %v262 = vadd.f32 %v163, %v261
    %v263 = vpop.f32.mrf.mxu0
    %v264 = vpop.f32.mrf.mxu0
    %v265 = vadd.f32 %v168, %v264
    %v266 = vpop.f32.mrf.mxu0
    %267 = vdwg.mxu0
    %v268 = vmax.f32 %v254, 0.0
    %v269 = vmax.f32 %v257, 0.0
    %v270 = vmax.f32 %v262, 0.0
    %v271 = vmax.f32 %v265, 0.0
    %v272 = vld [vmem:[%s5] sm:$0xf]
    %v273 = vld [vmem:[%s5 + $0x4] sm:$0xf]
    %v274 = vld [vmem:[%s6] sm:$0xff]
    %v275 = vld [vmem:[%s6 + $0x8] sm:$0xff]
    %277 = vset.pattern.permute.xlu0 0
    %278 = vperm.xlu0 %277, %v274
    %v279 = vpop.permute.xlu0 %278
    %282 = vset.pattern.permute.xlu0 0
    %283 = vperm.xlu0 %282, %v275
    %v284 = vpop.permute.xlu0 %283
    %v288 = vunpack.c.l.b16 %v272
    %v289 = vunpack.c.l.b16 %v273
    %v290 = vpack.c.b16 %v289, %v288
    %v292 = vsel %vm180, %v290, 0
    %294 = vmatprep.subr.mxu0 0.0
    %295 = vmatpush1.msra.mxu0 0.0
    %296 = vmatprep.subr.mxu0 0.0
    %297 = vmatpush1.msra.mxu0 0.0
    %298 = vmatprep.subr.mxu0 0.0
    %299 = vmatpush1.msra.mxu0 0.0
    %300 = vmatprep.subr.mxu0 0.0
    %301 = vmatpush1.msra.mxu0 0.0
    %302 = vmatprep.subr.mxu0 0.0
    %303 = vmatpush1.msra.mxu0 0.0
    %304 = vmatprep.subr.mxu0 0.0
    %305 = vmatpush1.msra.mxu0 0.0
    %306 = vmatprep.subr.mxu0 0.0
    %307 = vmatpush1.msra.mxu0 0.0
    %308 = vmatprep.subr.mxu0 0.0
    %309 = vmatpush1.msra.mxu0 0.0
    %310 = vmatprep.subr.mxu0 0.0
    %311 = vmatpush1.msra.mxu0 0.0
    %312 = vmatprep.subr.mxu0 0.0
    %313 = vmatpush1.msra.mxu0 0.0
    %314 = vmatprep.subr.mxu0 0.0
    %315 = vmatpush1.msra.mxu0 0.0
    %316 = vmatprep.subr.mxu0 0.0
    %317 = vmatpush1.msra.mxu0 0.0
    %318 = vmatprep.subr.mxu0 0.0
    %319 = vmatpush1.msra.mxu0 %v271
    %320 = vmatprep.subr.mxu0 0.0
    %321 = vmatpush1.msra.mxu0 %v270
    %322 = vmatprep.subr.mxu0 0.0
    %323 = vmatpush1.msra.mxu0 %v269
    %324 = vmatprep.subr.mxu0 0.0
    %325 = vmatpush1.msra.mxu0 %v268
    %326 = vmatprep.subr.mxu0 0.0
    %327 = vmatpush2.msra.mxu0 0.0
    %328 = vmatprep.subr.mxu0 0.0
    %329 = vmatpush2.msra.mxu0 0.0
    %330 = vmatprep.subr.mxu0 0.0
    %331 = vmatpush2.msra.mxu0 0.0
    %332 = vmatprep.subr.mxu0 0.0
    %333 = vmatpush2.msra.mxu0 0.0
    %334 = vmatprep.subr.mxu0 0.0
    %335 = vmatpush2.msra.mxu0 0.0
    %336 = vmatprep.subr.mxu0 0.0
    %337 = vmatpush2.msra.mxu0 0.0
    %338 = vmatprep.subr.mxu0 0.0
    %339 = vmatpush2.msra.mxu0 0.0
    %340 = vmatprep.subr.mxu0 0.0
    %341 = vmatpush2.msra.mxu0 0.0
    %342 = vmatprep.subr.mxu0 0.0
    %343 = vmatpush2.msra.mxu0 0.0
    %344 = vmatprep.subr.mxu0 0.0
    %345 = vmatpush2.msra.mxu0 0.0
    %346 = vmatprep.subr.mxu0 0.0
    %347 = vmatpush2.msra.mxu0 0.0
    %348 = vmatprep.subr.mxu0 0.0
    %349 = vmatpush2.msra.mxu0 0.0
    %350 = vmatprep.subr.mxu0 0.0
    %351 = vmatpush2.msra.mxu0 0.0
    %352 = vmatprep.subr.mxu0 0.0
    %353 = vmatpush2.msra.mxu0 0.0
    %354 = vmatprep.subr.mxu0 0.0
    %355 = vmatpush2.msra.mxu0 0.0
    %356 = vmatprep.subr.mxu0 0.0
    %357 = vmatpush2.msra.mxu0 0.0
    %358 = vmatprep.mubr.bf16.mxu0 0
    %359 = vmatmul.mubr.bf16.gmra.mxu0 %v292
    %v360 = vpop.f32.mrf.mxu0
    %v361 = vadd.f32 %v279, %v360
    %v362 = vpop.f32.mrf.mxu0
    %v363 = vpop.f32.mrf.mxu0
    %v364 = vadd.f32 %v284, %v363
    %v365 = vpop.f32.mrf.mxu0
    %366 = vdwg.mxu0
    %v367 = vmax.f32 %v361, 0.0
    %v368 = vmax.f32 %v364, 0.0
    %v369 = vld [vmem:[%s7] sm:$0x1]
    %v370 = vld [vmem:[#allocation2] sm:$0x1]
    %372 = vset.pattern.permute.xlu0 0
    %373 = vperm.xlu0 %372, %v370
    %v374 = vpop.permute.xlu0 %373
    %v376 = vlaneseq
    %v377 = vshrl.u32 %v376, 7
    %v378 = vsub.s32 0, %v377
    %v379 = vrot.slane %v374, %v378
    %v381 = vsel %vm82, %v369, 0
    %383 = vmatprep.subr.mxu0 0.0
    %384 = vmatpush1.msra.mxu0 0.0
    %385 = vmatprep.subr.mxu0 0.0
    %386 = vmatpush1.msra.mxu0 0.0
    %387 = vmatprep.subr.mxu0 0.0
    %388 = vmatpush1.msra.mxu0 0.0
    %389 = vmatprep.subr.mxu0 0.0
    %390 = vmatpush1.msra.mxu0 0.0
    %391 = vmatprep.subr.mxu0 0.0
    %392 = vmatpush1.msra.mxu0 0.0
    %393 = vmatprep.subr.mxu0 0.0
    %394 = vmatpush1.msra.mxu0 0.0
    %395 = vmatprep.subr.mxu0 0.0
    %396 = vmatpush1.msra.mxu0 0.0
    %397 = vmatprep.subr.mxu0 0.0
    %398 = vmatpush1.msra.mxu0 0.0
    %399 = vmatprep.subr.mxu0 0.0
    %400 = vmatpush1.msra.mxu0 0.0
    %401 = vmatprep.subr.mxu0 0.0
    %402 = vmatpush1.msra.mxu0 0.0
    %403 = vmatprep.subr.mxu0 0.0
    %404 = vmatpush1.msra.mxu0 0.0
    %405 = vmatprep.subr.mxu0 0.0
    %406 = vmatpush1.msra.mxu0 0.0
    %407 = vmatprep.subr.mxu0 0.0
    %408 = vmatpush1.msra.mxu0 0.0
    %409 = vmatprep.subr.mxu0 0.0
    %410 = vmatpush1.msra.mxu0 0.0
    %411 = vmatprep.subr.mxu0 0.0
    %412 = vmatpush1.msra.mxu0 %v368
    %413 = vmatprep.subr.mxu0 0.0
    %414 = vmatpush1.msra.mxu0 %v367
    %415 = vmatprep.subr.mxu0 0.0
    %416 = vmatpush2.msra.mxu0 0.0
    %417 = vmatprep.subr.mxu0 0.0
    %418 = vmatpush2.msra.mxu0 0.0
    %419 = vmatprep.subr.mxu0 0.0
    %420 = vmatpush2.msra.mxu0 0.0
    %421 = vmatprep.subr.mxu0 0.0
    %422 = vmatpush2.msra.mxu0 0.0
    %423 = vmatprep.subr.mxu0 0.0
    %424 = vmatpush2.msra.mxu0 0.0
    %425 = vmatprep.subr.mxu0 0.0
    %426 = vmatpush2.msra.mxu0 0.0
    %427 = vmatprep.subr.mxu0 0.0
    %428 = vmatpush2.msra.mxu0 0.0
    %429 = vmatprep.subr.mxu0 0.0
    %430 = vmatpush2.msra.mxu0 0.0
    %431 = vmatprep.subr.mxu0 0.0
    %432 = vmatpush2.msra.mxu0 0.0
    %433 = vmatprep.subr.mxu0 0.0
    %434 = vmatpush2.msra.mxu0 0.0
    %435 = vmatprep.subr.mxu0 0.0
    %436 = vmatpush2.msra.mxu0 0.0
    %437 = vmatprep.subr.mxu0 0.0
    %438 = vmatpush2.msra.mxu0 0.0
    %439 = vmatprep.subr.mxu0 0.0
    %440 = vmatpush2.msra.mxu0 0.0
    %441 = vmatprep.subr.mxu0 0.0
    %442 = vmatpush2.msra.mxu0 0.0
    %443 = vmatprep.subr.mxu0 0.0
    %444 = vmatpush2.msra.mxu0 0.0
    %445 = vmatprep.subr.mxu0 0.0
    %446 = vmatpush2.msra.mxu0 0.0
    %447 = vmatprep.mubr.bf16.mxu0 0
    %448 = vmatmul.mubr.bf16.gmra.mxu0 %v381
    %v449 = vpop.f32.mrf.mxu0
    %v450 = vadd.f32 %v379, %v449
    %v451 = vpop.f32.mrf.mxu0
    %v452 = vpop.f32.mrf.mxu0
    %v453 = vpop.f32.mrf.mxu0
    %454 = vdwg.mxu0
    %455 = vst [vmem:[#allocation3] sm:$0x1] %v450
    // Predicated region
    $region38: #{tpu_custom_call.1} parent=1 // pred_check
      _
    $region39: #{tpu_custom_call.1} parent=1 // pred_check_branch
      %457 = sbr.rel (0) target = $region41
    $region40: #{tpu_custom_call.1} parent=1 // pred_region
      %s459 = ssub.s32 16, 16
      %460 = vsyncadd [#allocation4], %s459
      %s462 = sshll.u32 [#allocation3], 4
      %s463 = int_to_ptr.vmem [resolvable:$true] %s462
      %465 = dma.vmem_to_hbm [thread:$0]  %s463, 16, %s9, [#allocation4]
    $region41: #{tpu_custom_call.1} parent=1 // pred_fallthru
      _
    // Predicated region
    $region42: #{tpu_custom_call.1} parent=1 // pred_check
      _
    $region43: #{tpu_custom_call.1} parent=1 // pred_check_branch
      %467 = sbr.rel (0) target = $region45
    $region44: #{tpu_custom_call.1} parent=1 // pred_region
      %468 = dma.done [#allocation4], 16
    $region45: #{tpu_custom_call.1} parent=1 // pred_fallthru
      _
    %469 = vsyncpa [#allocation4], 1

</llo_original>
